<compile_context>
chip_gen: v7x
topology: tpu7x:2x2x1
jax: 0.10.0
libtpu: 0.0.40
codegen_flags: <defaults>
</compile_context>

<pallas_src>
import functools

import jax
import jax.numpy as jnp
from jax.experimental import pallas as pl
from jax.experimental.pallas import tpu as pltpu


def _round_up(x, m):
    return ((x + m - 1) // m) * m


def _cdiv(a, b):
    return -(-a // b)


def _validity_mask(shape, i, j, tm, thw, n_rows, hw, rows_ragged, cols_ragged):
    """Bool mask of in-bounds elements for the (tm, thw) tile at block (i, j).

    Only the statically-ragged dimensions contribute ops; returns None when
    nothing is ragged. The mask is applied unconditionally on all tiles when
    ragged: the couple of VALU ops per element are pure filler under the HBM
    roofline, so pl.when-predicating it isn't worth duplicating the body.
    """
    mask = None
    if rows_ragged:
        row_ids = jax.lax.broadcasted_iota(jnp.int32, shape, 0) + i * tm
        mask = row_ids < n_rows
    if cols_ragged:
        col_ids = jax.lax.broadcasted_iota(jnp.int32, shape, 1) + j * thw
        cmask = col_ids < hw
        mask = cmask if mask is None else jnp.logical_and(mask, cmask)
    return mask


def _gaussian_loss_fullrow_kernel(t_ref, s_ref, o_ref,
                                  *, n_rows, hw, tm, rows_ragged):
    """n_j == 1: the whole H*W row is resident -> exact two-pass mean/variance."""
    i = pl.program_id(0)

    t = t_ref[...].astype(jnp.float32)            # (tm, hw)
    s = s_ref[...].astype(jnp.float32)

    if rows_ragged:
        mask = _validity_mask(t.shape, i, 0, tm, t.shape[1], n_rows, hw, True, False)
        t = jnp.where(mask, t, 0.0)
        s = jnp.where(mask, s, 0.0)

    inv_hw = jnp.float32(1.0 / hw)
    t_mean = jnp.sum(t, axis=1, keepdims=True) * inv_hw
    s_mean = jnp.sum(s, axis=1, keepdims=True) * inv_hw
    # Zeroed (out-of-bounds) rows have mean 0, so their deviations stay exactly 0
    # and contribute 0 to the loss -> no re-masking needed.
    td = t - t_mean
    sd = s - s_mean
    t_var = jnp.sum(td * td, axis=1, keepdims=True) * inv_hw
    s_var = jnp.sum(sd * sd, axis=1, keepdims=True) * inv_hw

    row_loss = (t_mean - s_mean) ** 2 + (t_var - s_var) ** 2
    o_ref[...] = (jnp.sum(row_loss) * jnp.float32(1.0 / n_rows)).reshape(1, 1, 1)


def _gaussian_loss_tiled_kernel(t_ref, s_ref, o_ref,
                                t_sum, s_sum, t_sq, s_sq,
                                *, n_rows, hw, tm, thw, rows_ragged, cols_ragged):
    """n_j > 1: H*W is tiled; single-pass statistics carried in VMEM scratch."""
    i = pl.program_id(0)          # row-tile index ("parallel")
    j = pl.program_id(1)          # spatial-tile index ("arbitrary", innermost)
    n_j = pl.num_programs(1)

    @pl.when(j == 0)
    def _():
        t_sum[...] = jnp.zeros_like(t_sum)
        s_sum[...] = jnp.zeros_like(s_sum)
        t_sq[...] = jnp.zeros_like(t_sq)
        s_sq[...] = jnp.zeros_like(s_sq)

    t = t_ref[...].astype(jnp.float32)            # (tm, thw)
    s = s_ref[...].astype(jnp.float32)

    if rows_ragged or cols_ragged:
        mask = _validity_mask(t.shape, i, j, tm, thw, n_rows, hw,
                              rows_ragged, cols_ragged)
        t = jnp.where(mask, t, 0.0)
        s = jnp.where(mask, s, 0.0)

    t_sum[...] += jnp.sum(t, axis=1, keepdims=True)
    s_sum[...] += jnp.sum(s, axis=1, keepdims=True)
    t_sq[...] += jnp.sum(t * t, axis=1, keepdims=True)
    s_sq[...] += jnp.sum(s * s, axis=1, keepdims=True)

    @pl.when(j == n_j - 1)
    def _():
        inv_hw = jnp.float32(1.0 / hw)
        t_mean = t_sum[...] * inv_hw
        s_mean = s_sum[...] * inv_hw
        # E[x^2] - mean^2, clamped at 0 against f32 cancellation.
        t_var = jnp.maximum(t_sq[...] * inv_hw - t_mean * t_mean, 0.0)
        s_var = jnp.maximum(s_sq[...] * inv_hw - s_mean * s_mean, 0.0)
        row_loss = (t_mean - s_mean) ** 2 + (t_var - s_var) ** 2
        o_ref[...] = (jnp.sum(row_loss) * jnp.float32(1.0 / n_rows)).reshape(1, 1, 1)


def gaussian_loss(teacher_feat, student_feat, *, max_tile_elems=None):
    """teacher_feat, student_feat: (N, C, H, W) arrays. Returns scalar f32 loss.

    max_tile_elems: optional cap on tm*thw (testing hook to force the H*W-tiled
    path on small inputs).
    """
    assert teacher_feat.shape == student_feat.shape
    n, c, h, w = teacher_feat.shape
    rows = n * c
    hw = h * w

    # Flatten NCHW -> (N*C, H*W); contiguous reshape is free. Keep native dtype
    # (kernel casts per tile), so bf16 inputs move half the HBM bytes.
    t2 = teacher_feat.reshape(rows, hw)
    s2 = student_feat.reshape(rows, hw)
    itembytes = t2.dtype.itemsize + s2.dtype.itemsize    # bytes/element, both inputs

    # Per-TensorCore VMEM budget; clamp to 64 MiB so a chip-level (128 MiB)
    # report on 2-TC parts can never overshoot the per-core capacity.
    try:
        vmem_cap = int(pltpu.get_tpu_info().vmem_capacity_bytes)
    except Exception:
        vmem_cap = 64 << 20
    safe_cap = min(vmem_cap, 64 << 20)
    input_budget = safe_cap // 4                  # inputs double-buffered + slack
    max_elems = input_budget // (2 * itembytes)   # budget for tm * thw elements
    if max_tile_elems is not None:
        max_elems = min(max_elems, max_tile_elems)

    rows8 = _round_up(rows, 8)

    if hw <= max_elems // 8:
        # Whole spatial extent per block -> exact two-pass mean/variance.
        thw = hw
        n_j = 1
        tm = min((max_elems // hw) // 8 * 8, 512, rows8)
        if rows8 >= 16:
            # Expose >= 2 row tiles so the "parallel" axis can shard across
            # TensorCores on 2-TC chips; tiles stay large, so it's free on 1-TC.
            tm = min(tm, _round_up(_cdiv(rows, 2), 8))
        tm = max(tm, 8)
    else:
        # H*W too large for even 8 full rows: tile the spatial axis as well.
        tm = min(rows8, 64)
        thw = max((max_elems // tm) // 128 * 128, 128)
        n_j = _cdiv(hw, thw)

    n_i = _cdiv(rows, tm)
    rows_ragged = (rows % tm) != 0
    cols_ragged = (n_j > 1) and ((hw % thw) != 0)

    tile_bytes = 2 * tm * thw * itembytes         # double-buffered, both inputs
    vmem_limit_bytes = int(min(safe_cap, max(32 << 20, tile_bytes + (8 << 20))))

    cost = pl.CostEstimate(flops=8 * rows * hw,
                           transcendentals=0,
                           bytes_accessed=rows * hw * itembytes + 4 * n_i)

    out_shape = jax.ShapeDtypeStruct((n_i, 1, 1), jnp.float32)

    if n_j == 1:
        kernel = functools.partial(_gaussian_loss_fullrow_kernel,
                                   n_rows=rows, hw=hw, tm=tm,
                                   rows_ragged=rows_ragged)
        partials = pl.pallas_call(
            kernel,
            out_shape=out_shape,
            grid_spec=pltpu.PrefetchScalarGridSpec(
                num_scalar_prefetch=0,
                grid=(n_i,),
                in_specs=[pl.BlockSpec((tm, hw), lambda i: (i, 0)),
                          pl.BlockSpec((tm, hw), lambda i: (i, 0))],
                out_specs=pl.BlockSpec((1, 1, 1), lambda i: (i, 0, 0)),
            ),
            compiler_params=pltpu.CompilerParams(
                dimension_semantics=("parallel",),
                vmem_limit_bytes=vmem_limit_bytes,
            ),
            cost_estimate=cost,
        )(t2, s2)
    else:
        kernel = functools.partial(_gaussian_loss_tiled_kernel,
                                   n_rows=rows, hw=hw, tm=tm, thw=thw,
                                   rows_ragged=rows_ragged,
                                   cols_ragged=cols_ragged)
        partials = pl.pallas_call(
            kernel,
            out_shape=out_shape,
            grid_spec=pltpu.PrefetchScalarGridSpec(
                num_scalar_prefetch=0,
                grid=(n_i, n_j),
                in_specs=[pl.BlockSpec((tm, thw), lambda i, j: (i, j)),
                          pl.BlockSpec((tm, thw), lambda i, j: (i, j))],
                out_specs=pl.BlockSpec((1, 1, 1), lambda i, j: (i, 0, 0)),
                scratch_shapes=[pltpu.VMEM((tm, 1), jnp.float32),   # teacher sums
                                pltpu.VMEM((tm, 1), jnp.float32),   # student sums
                                pltpu.VMEM((tm, 1), jnp.float32),   # teacher sum sq
                                pltpu.VMEM((tm, 1), jnp.float32)],  # student sum sq
            ),
            compiler_params=pltpu.CompilerParams(
                dimension_semantics=("parallel", "arbitrary"),
                vmem_limit_bytes=vmem_limit_bytes,
            ),
            cost_estimate=cost,
        )(t2, s2)

    # Each partial is already divided by N*C; the final reduce is over <= n_i scalars.
    return jnp.sum(partials)


def _reference_gaussian_loss(teacher_feat, student_feat):
    t = teacher_feat.astype(jnp.float32)
    s = student_feat.astype(jnp.float32)
    t_mean = t.mean(axis=(2, 3), keepdims=True)
    s_mean = s.mean(axis=(2, 3), keepdims=True)
    t_var = t.var(axis=(2, 3), keepdims=True, ddof=0)
    s_var = s.var(axis=(2, 3), keepdims=True, ddof=0)
    return ((t_mean - s_mean) ** 2).mean() + ((t_var - s_var) ** 2).mean()


if __name__ == "__main__":
    key = jax.random.PRNGKey(0)
    k1, k2, k3, k4 = jax.random.split(key, 4)

    # 1) Small clean NCHW shape (full-row / two-pass path).
    teacher = jax.random.normal(k1, (2, 8, 16, 16), dtype=jnp.float32)
    student = jax.random.normal(k2, (2, 8, 16, 16), dtype=jnp.float32) * 1.3 + 0.2
    loss = gaussian_loss(teacher, student)
    jax.block_until_ready(loss)
    ref = _reference_gaussian_loss(teacher, student)
    assert jnp.allclose(loss, ref, rtol=1e-4, atol=1e-6), (loss, ref)

    # 2) Ragged rows (N*C not a multiple of 8): exercises the in-kernel row mask.
    teacher2 = jax.random.normal(k3, (2, 5, 7, 9), dtype=jnp.float32)
    student2 = jax.random.normal(k4, (2, 5, 7, 9), dtype=jnp.float32) * 0.7 - 0.1
    loss2 = gaussian_loss(teacher2, student2)
    jax.block_until_ready(loss2)
    ref2 = _reference_gaussian_loss(teacher2, student2)
    assert jnp.allclose(loss2, ref2, rtol=1e-4, atol=1e-6), (loss2, ref2)

    # 3) bf16 inputs (native-dtype streaming, per-tile f32 cast).
    teacher3 = teacher.astype(jnp.bfloat16)
    student3 = student.astype(jnp.bfloat16)
    loss3 = gaussian_loss(teacher3, student3)
    jax.block_until_ready(loss3)
    ref3 = _reference_gaussian_loss(teacher3, student3)
    assert jnp.allclose(loss3, ref3, rtol=1e-4, atol=1e-6), (loss3, ref3)

    # 4) Force the H*W-tiled (single-pass stats) path with ragged rows and cols.
    k5, k6 = jax.random.split(k1)
    teacher4 = jax.random.normal(k5, (1, 4, 25, 40), dtype=jnp.float32)
    student4 = jax.random.normal(k6, (1, 4, 25, 40), dtype=jnp.float32) * 1.1 + 0.3
    loss4 = gaussian_loss(teacher4, student4, max_tile_elems=4096)
    jax.block_until_ready(loss4)
    ref4 = _reference_gaussian_loss(teacher4, student4)
    assert jnp.allclose(loss4, ref4, rtol=1e-4, atol=1e-6), (loss4, ref4)

    print("KERNEL_OK")
</pallas_src>

<mosaic_0001>
module attributes {stable_mosaic.version = 11 : i64} {
  func.func @_gaussian_loss_fullrow_kernel(%arg0: i32, %arg1: memref<8x256xf32, #tpu.memory_space<vmem>>, %arg2: memref<8x256xf32, #tpu.memory_space<vmem>>, %arg3: memref<1x1x1xf32, #tpu.memory_space<vmem>>) attributes {dimension_semantics = [#tpu.dimension_semantics<parallel>], iteration_bounds = array<i64: 2>, scalar_prefetch = 0 : i64, scratch_operands = 0 : i64, tpu.core_type = #tpu.core_type<tc>, window_params = [{transform_indices = @transform_0, window_bounds = array<i64: 8, 256>}, {transform_indices = @transform_1, window_bounds = array<i64: 8, 256>}, {transform_indices = @transform_2, window_bounds = array<i64: 1, 1, 1>}]} {
    %c0 = arith.constant 0 : index
    %c0_0 = arith.constant 0 : index
    %0 = vector.load %arg1[%c0, %c0_0] : memref<8x256xf32, #tpu.memory_space<vmem>>, vector<8x256xf32>
    %c0_1 = arith.constant 0 : index
    %c0_2 = arith.constant 0 : index
    %1 = vector.load %arg2[%c0_1, %c0_2] : memref<8x256xf32, #tpu.memory_space<vmem>>, vector<8x256xf32>
    %cst = arith.constant dense<0.000000e+00> : vector<8xf32>
    %2 = vector.multi_reduction <add>, %0, %cst [1] : vector<8x256xf32> to vector<8xf32>
    %3 = vector.shape_cast %2 : vector<8xf32> to vector<8x1xf32>
    %cst_3 = arith.constant 3.906250e-03 : f32
    %4 = vector.broadcast %cst_3 : f32 to vector<8x1xf32>
    %5 = arith.mulf %3, %4 : vector<8x1xf32>
    %cst_4 = arith.constant dense<0.000000e+00> : vector<8xf32>
    %6 = vector.multi_reduction <add>, %1, %cst_4 [1] : vector<8x256xf32> to vector<8xf32>
    %7 = vector.shape_cast %6 : vector<8xf32> to vector<8x1xf32>
    %cst_5 = arith.constant 3.906250e-03 : f32
    %8 = vector.broadcast %cst_5 : f32 to vector<8x1xf32>
    %9 = arith.mulf %7, %8 : vector<8x1xf32>
    %10 = vector.broadcast %5 : vector<8x1xf32> to vector<8x256xf32>
    %11 = arith.subf %0, %10 : vector<8x256xf32>
    %12 = vector.broadcast %9 : vector<8x1xf32> to vector<8x256xf32>
    %13 = arith.subf %1, %12 : vector<8x256xf32>
    %14 = arith.mulf %11, %11 : vector<8x256xf32>
    %cst_6 = arith.constant dense<0.000000e+00> : vector<8xf32>
    %15 = vector.multi_reduction <add>, %14, %cst_6 [1] : vector<8x256xf32> to vector<8xf32>
    %16 = vector.shape_cast %15 : vector<8xf32> to vector<8x1xf32>
    %cst_7 = arith.constant 3.906250e-03 : f32
    %17 = vector.broadcast %cst_7 : f32 to vector<8x1xf32>
    %18 = arith.mulf %16, %17 : vector<8x1xf32>
    %19 = arith.mulf %13, %13 : vector<8x256xf32>
    %cst_8 = arith.constant dense<0.000000e+00> : vector<8xf32>
    %20 = vector.multi_reduction <add>, %19, %cst_8 [1] : vector<8x256xf32> to vector<8xf32>
    %21 = vector.shape_cast %20 : vector<8xf32> to vector<8x1xf32>
    %cst_9 = arith.constant 3.906250e-03 : f32
    %22 = vector.broadcast %cst_9 : f32 to vector<8x1xf32>
    %23 = arith.mulf %21, %22 : vector<8x1xf32>
    %24 = arith.subf %5, %9 : vector<8x1xf32>
    %25 = arith.mulf %24, %24 : vector<8x1xf32>
    %26 = arith.subf %18, %23 : vector<8x1xf32>
    %27 = arith.mulf %26, %26 : vector<8x1xf32>
    %28 = arith.addf %25, %27 : vector<8x1xf32>
    %29 = vector.shape_cast %28 : vector<8x1xf32> to vector<1x8x1xf32>
    %cst_10 = arith.constant dense<0.000000e+00> : vector<1xf32>
    %30 = vector.multi_reduction <add>, %29, %cst_10 [1, 2] : vector<1x8x1xf32> to vector<1xf32>
    %31 = vector.shape_cast %30 : vector<1xf32> to vector<1x1x1xf32>
    %32 = vector.extract %31[0, 0, 0] : f32 from vector<1x1x1xf32>
    %cst_11 = arith.constant 6.250000e-02 : f32
    %33 = arith.mulf %32, %cst_11 : f32
    %34 = vector.broadcast %33 : f32 to vector<1x1x1xf32>
    %c0_12 = arith.constant 0 : index
    %c0_13 = arith.constant 0 : index
    %c0_14 = arith.constant 0 : index
    %35 = vector.load %arg3[%c0_12, %c0_13, %c0_14] : memref<1x1x1xf32, #tpu.memory_space<vmem>>, vector<1x1x1xf32>
    tpu.vector_store %arg3[%c0_12, %c0_13, %c0_14], %34 {strides = array<i32>} : memref<1x1x1xf32, #tpu.memory_space<vmem>>, vector<1x1x1xf32>,
    return
  }
  func.func @transform_0(%arg0: i32) -> (i32, i32) {
    %c0_i32 = arith.constant 0 : i32
    %c0_i32_0 = arith.constant 0 : i32
    return %arg0, %c0_i32 : i32, i32
  }
  func.func @transform_1(%arg0: i32) -> (i32, i32) {
    %c0_i32 = arith.constant 0 : i32
    %c0_i32_0 = arith.constant 0 : i32
    return %arg0, %c0_i32 : i32, i32
  }
  func.func @transform_2(%arg0: i32) -> (i32, i32, i32) {
    %c0_i32 = arith.constant 0 : i32
    %c0_i32_0 = arith.constant 0 : i32
    %c0_i32_1 = arith.constant 0 : i32
    return %arg0, %c0_i32, %c0_i32_0 : i32, i32, i32
  }
}

</mosaic_0001>

<llo_original>
// kernel: tpu_custom_call.1
$region0: #{tpu_custom_call.1}
  #allocation0 [shape = 'u32[]', space=smem, size = 0x4, offset = 0x4, fixed_abs, tag = 'smem constant byte address 0x4 - core index']
  #allocation1 [shape = 'u32[144,128]{1,0:T(1,128)}', space=vmem, size = 0x12000, scoped, tag = 'internal scratch']
  %s0 = inlined_call_operand.hbm [shape: f32[16,256], index: 0, kind: input, shape index: {}]
  %s1 = inlined_call_operand.hbm [shape: f32[16,256], index: 1, kind: input, shape index: {}]
  %s2 = inlined_call_operand.vmem [shape: f32[2,1,1], index: 2, kind: output, shape index: {}]
  %s3 = sld [smem:[#allocation0]]
  $region49: #{tpu_custom_call.1} parent=0
    _
  %s5 = ssub.s32 1, %s3
  %s6 = scalar_select 0, %s5, %s3
  $region1: #{tpu_custom_call.1} parent=0
    #allocation2 [shape = 'u8[16384]{0}', space=vmem, size = 0x4000, scoped, tag = 'input window, operand 0']
    #allocation3 [shape = 's32[2]{0}', space=sflag, size = 0x8, scoped, tag = 'scoped memory for tpu_custom_call.1']
    #allocation4 [shape = 'u8[16384]{0}', space=vmem, size = 0x4000, scoped, tag = 'input window, operand 1']
    #allocation5 [shape = 's32[2]{0}', space=sflag, size = 0x8, scoped, tag = 'scoped memory for tpu_custom_call.1']
    %7 = vsyncpa [#allocation3], 0
    %s8 = scalar_lea.sflag [#allocation3], 1
    %9 = vsyncpa %s8, 0
    %10 = vsyncpa [#allocation5], 0
    %s11 = scalar_lea.sflag [#allocation5], 1
    %12 = vsyncpa %s11, 0
    loop: start=0, step=1, limit=4
    $region2: #{tpu_custom_call.1} parent=1 // loop_pre_header
      _
    $region3: #{tpu_custom_call.1} parent=1 // loop_header
      %s14 = sphi 0, %s18
      %p15 = scmp.ge.s32.totalorder %s14, 4
      %s24 = sphi 0, %s26
      %s27 = sphi 0, %s24
      %s28 = sphi 0, %s27
      %s44 = sphi 0, %s28
      %s50 = sphi 0, %s52
      %s53 = sphi 0, %s50
      %s54 = sphi 0, %s53
      %s70 = sphi 0, %s54
      %s76 = sphi 0, %s78
      %s79 = sphi 0, %s76
      %s80 = sphi 0, %s79
      %s96 = sphi 0, %s80
    $region4: #{tpu_custom_call.1} parent=1 // loop_header_branch
      %17 = sbr.rel (%p15) target = $region8
    $region5: #{tpu_custom_call.1} parent=1 // loop_body
      %s19 = ssub.s32 %s14, 1
      %s20 = ssub.s32 %s14, 2
      %s21 = sadd.s32 %s14, 1
      %s22 = ssub.s32 %s14, %s21
      %p23 = scmp.eq.s32.totalorder %s22, 0
      %s25 = sadd.s32 %s24, 1
      %s26 = scalar_select %p23, %s24, %s25
      %p29 = pneg %p23
      %p30 = scmp.eq.s32.totalorder %s14, 1
      %p31 = por %p29, %p30
      %p32 = scmp.ne.s32.totalorder %s24, %s27
      %p33 = scmp.eq.s32.totalorder %s14, 0
      %p34 = por %p32, %p33
      %p35 = scmp.ne.s32.totalorder %s24, %s27
      %p36 = scmp.eq.s32.totalorder %s19, 1
      %p37 = por %p35, %p36
      %p38 = scmp.ne.s32.totalorder %s27, %s28
      %p39 = scmp.eq.s32.totalorder %s19, 0
      %p40 = por %p38, %p39
      %p41 = scmp.ne.s32.totalorder %s27, %s28
      %p42 = scmp.eq.s32.totalorder %s20, 1
      %p43 = por %p41, %p42
      %p45 = scmp.ne.s32.totalorder %s28, %s44
      %p46 = scmp.eq.s32.totalorder %s20, 0
      %p47 = por %p45, %p46
      %s48 = ssub.s32 %s14, %s21
      %p49 = scmp.eq.s32.totalorder %s48, 0
      %s51 = sadd.s32 %s50, 1
      %s52 = scalar_select %p49, %s50, %s51
      %p55 = pneg %p49
      %p56 = scmp.eq.s32.totalorder %s14, 1
      %p57 = por %p55, %p56
      %p58 = scmp.ne.s32.totalorder %s50, %s53
      %p59 = scmp.eq.s32.totalorder %s14, 0
      %p60 = por %p58, %p59
      %p61 = scmp.ne.s32.totalorder %s50, %s53
      %p62 = scmp.eq.s32.totalorder %s19, 1
      %p63 = por %p61, %p62
      %p64 = scmp.ne.s32.totalorder %s53, %s54
      %p65 = scmp.eq.s32.totalorder %s19, 0
      %p66 = por %p64, %p65
      %p67 = scmp.ne.s32.totalorder %s53, %s54
      %p68 = scmp.eq.s32.totalorder %s20, 1
      %p69 = por %p67, %p68
      %p71 = scmp.ne.s32.totalorder %s54, %s70
      %p72 = scmp.eq.s32.totalorder %s20, 0
      %p73 = por %p71, %p72
      %s74 = ssub.s32 %s14, %s21
      %p75 = scmp.eq.s32.totalorder %s74, 0
      %s77 = sadd.s32 %s76, 1
      %s78 = scalar_select %p75, %s76, %s77
      %p81 = pneg %p75
      %p82 = scmp.eq.s32.totalorder %s14, 1
      %p83 = por %p81, %p82
      %p84 = scmp.ne.s32.totalorder %s76, %s79
      %p85 = scmp.eq.s32.totalorder %s14, 0
      %p86 = por %p84, %p85
      %p87 = scmp.ne.s32.totalorder %s76, %s79
      %p88 = scmp.eq.s32.totalorder %s19, 1
      %p89 = por %p87, %p88
      %p90 = scmp.ne.s32.totalorder %s79, %s80
      %p91 = scmp.eq.s32.totalorder %s19, 0
      %p92 = por %p90, %p91
      %p93 = scmp.ne.s32.totalorder %s79, %s80
      %p94 = scmp.eq.s32.totalorder %s20, 1
      %p95 = por %p93, %p94
      %p97 = scmp.ne.s32.totalorder %s80, %s96
      %p98 = scmp.eq.s32.totalorder %s20, 0
      %p99 = por %p97, %p98
      %p100 = scmp.le.s32.totalorder 1, %s14
      %p101 = scmp.lt.s32.totalorder %s14, 3
      %p102 = pnand %p100, %p101
      %p103 = pneg %p102
      // Predicated region
      $region9: #{tpu_custom_call.1} parent=5 // pred_check
        _
      $region10: #{tpu_custom_call.1} parent=5 // pred_check_branch
        %105 = sbr.rel (%p102) target = $region12
      $region11: #{tpu_custom_call.1} parent=5 // pred_region
        %s106 = ssub.s32 %s14, 1
      $region12: #{tpu_custom_call.1} parent=5 // pred_fallthru
        _
      %p107 = scmp.lt.s32.totalorder %s14, 2
      // Predicated region
      $region13: #{tpu_custom_call.1} parent=5 // pred_check
        %p108 = pneg %p107
      $region14: #{tpu_custom_call.1} parent=5 // pred_check_branch
        %110 = sbr.rel (%p108) target = $region16
      $region15: #{tpu_custom_call.1} parent=5 // pred_region
        // Predicated region
        $region17: #{tpu_custom_call.1} parent=15 // pred_check
          %p111 = pneg %p34
        $region18: #{tpu_custom_call.1} parent=15 // pred_check_branch
          %113 = sbr.rel (%p111) target = $region20
        $region19: #{tpu_custom_call.1} parent=15 // pred_region
          %s114 = sand.u32 %s24, 1
          %s115 = scalar_lea.sflag [#allocation3], %s114
          %s116 = sand.u32 %s24, 1
          %s117 = smul.addr %s116, 16
          %s118 = scalar_lea.vmem [#allocation2], %s117
          %s120 = ssub.s32 256, 256
          %121 = vsyncadd %s115, %s120
          %s122 = smul.addr %s14, 2
          %s123 = smul.addr %s122, 128
          %s124 = scalar_lea.hbm %s0, %s123
          %s126 = sshll.u32 %s118, 4
          %s127 = int_to_ptr.vmem [resolvable:$true] %s126
          %129 = dma.hbm_to_vmem [thread:$0]  %s124, 256, %s127, %s115
        $region20: #{tpu_custom_call.1} parent=15 // pred_fallthru
          _
        // Predicated region
        $region21: #{tpu_custom_call.1} parent=15 // pred_check
          %p130 = pneg %p60
        $region22: #{tpu_custom_call.1} parent=15 // pred_check_branch
          %132 = sbr.rel (%p130) target = $region24
        $region23: #{tpu_custom_call.1} parent=15 // pred_region
          %s133 = sand.u32 %s50, 1
          %s134 = scalar_lea.sflag [#allocation5], %s133
          %s135 = sand.u32 %s50, 1
          %s136 = smul.addr %s135, 16
          %s137 = scalar_lea.vmem [#allocation4], %s136
          %s139 = ssub.s32 256, 256
          %140 = vsyncadd %s134, %s139
          %s141 = smul.addr %s14, 2
          %s142 = smul.addr %s141, 128
          %s143 = scalar_lea.hbm %s1, %s142
          %s145 = sshll.u32 %s137, 4
          %s146 = int_to_ptr.vmem [resolvable:$true] %s145
          %148 = dma.hbm_to_vmem [thread:$0]  %s143, 256, %s146, %s134
        $region24: #{tpu_custom_call.1} parent=15 // pred_fallthru
          _
      $region16: #{tpu_custom_call.1} parent=5 // pred_fallthru
        _
      %p149 = scmp.le.s32.totalorder 1, %s14
      %p150 = scmp.lt.s32.totalorder %s14, 3
      %p151 = pnand %p149, %p150
      %p152 = pneg %p151
      // Predicated region
      $region25: #{tpu_custom_call.1} parent=5 // pred_check
        _
      $region26: #{tpu_custom_call.1} parent=5 // pred_check_branch
        %154 = sbr.rel (%p151) target = $region28
      $region27: #{tpu_custom_call.1} parent=5 // pred_region
        %s155 = ssub.s32 %s14, 1
        %s156 = sand.u32 %s27, 1
        %s157 = scalar_lea.sflag [#allocation3], %s156
        %s158 = sand.u32 %s27, 1
        %s159 = smul.addr %s158, 16
        %s160 = scalar_lea.vmem [#allocation2], %s159
        // Predicated region
        $region29: #{tpu_custom_call.1} parent=27 // pred_check
          %p161 = pneg %p40
        $region30: #{tpu_custom_call.1} parent=27 // pred_check_branch
          %163 = sbr.rel (%p161) target = $region32
        $region31: #{tpu_custom_call.1} parent=27 // pred_region
          %164 = dma.done %s157, 256
        $region32: #{tpu_custom_call.1} parent=27 // pred_fallthru
          _
        %s165 = sand.u32 %s53, 1
        %s166 = scalar_lea.sflag [#allocation5], %s165
        %s167 = sand.u32 %s53, 1
        %s168 = smul.addr %s167, 16
        %s169 = scalar_lea.vmem [#allocation4], %s168
        // Predicated region
        $region33: #{tpu_custom_call.1} parent=27 // pred_check
          %p170 = pneg %p66
        $region34: #{tpu_custom_call.1} parent=27 // pred_check_branch
          %172 = sbr.rel (%p170) target = $region36
        $region35: #{tpu_custom_call.1} parent=27 // pred_region
          %173 = dma.done %s166, 256
        $region36: #{tpu_custom_call.1} parent=27 // pred_fallthru
          _
        %s174 = sand.u32 %s27, 1
        %s175 = scalar_lea.sflag [#allocation3], %s174
        %s176 = sand.u32 %s27, 1
        %s177 = smul.addr %s176, 16
        %s178 = scalar_lea.vmem [#allocation2], %s177
        %p179 = pneg %p40
        %p180 = pneg %p37
        %s181 = sand.u32 %s53, 1
        %s182 = scalar_lea.sflag [#allocation5], %s181
        %s183 = sand.u32 %s53, 1
        %s184 = smul.addr %s183, 16
        %s185 = scalar_lea.vmem [#allocation4], %s184
        %p186 = pneg %p66
        %p187 = pneg %p63
        %p188 = pneg %p92
        %p189 = pneg %p89
        %p190 = scmp.lt.s32.totalorder %s19, 1
        %s191 = scalar_select %p190, %s19, 1
        %s192 = scalar_lea.vmem %s2, %s191
        %p193 = scmp.lt.s32.totalorder %s19, 1
        %s194 = scalar_select %p193, %s19, 1
        %s195 = scalar_lea.vmem %s2, %s194
        %v196 = vld [vmem:[%s160] sm:$0xff]
        %v197 = vld [vmem:[%s160 + $0x8] sm:$0xff]
        %v198 = vld [vmem:[%s169] sm:$0xff]
        %v199 = vld [vmem:[%s169 + $0x8] sm:$0xff]
        %v200 = vadd.f32 %v196, %v197
        %201 = vadd.xlane.f32.xlu0 %v200
        %v202 = vpop.xlane.xlu0 %201
        %v203 = vmul.f32 %v202, 0.00390625
        %v204 = vadd.f32 %v198, %v199
        %205 = vadd.xlane.f32.xlu0 %v204
        %v206 = vpop.xlane.xlu0 %205
        %v207 = vmul.f32 %v206, 0.00390625
        %v208 = vsub.f32 %v196, %v203
        %v209 = vsub.f32 %v197, %v203
        %v210 = vsub.f32 %v198, %v207
        %v211 = vsub.f32 %v199, %v207
        %v212 = vmul.f32 %v208, %v208
        %v213 = vmul.f32 %v209, %v209
        %v214 = vadd.f32 %v212, %v213
        %215 = vadd.xlane.f32.xlu0 %v214
        %v216 = vpop.xlane.xlu0 %215
        %v217 = vmul.f32 %v216, 0.00390625
        %v218 = vmul.f32 %v210, %v210
        %v219 = vmul.f32 %v211, %v211
        %v220 = vadd.f32 %v218, %v219
        %221 = vadd.xlane.f32.xlu0 %v220
        %v222 = vpop.xlane.xlu0 %221
        %v223 = vmul.f32 %v222, 0.00390625
        %v224 = vsub.f32 %v203, %v207
        %v225 = vmul.f32 %v224, %v224
        %v226 = vsub.f32 %v217, %v223
        %v227 = vmul.f32 %v226, %v226
        %v228 = vadd.f32 %v225, %v227
        %vm229 = vcmask 7168
        %v230 = vsel %vm229, %v228, 0.0
        %231 = vadd.xlane.f32.xlu0 %v230
        %v232 = vpop.xlane.xlu0 %231
        %v233 = vrot.slane %v232, 4
        %v234 = vadd.f32 %v232, %v233
        %v235 = vrot.slane %v234, 2
        %v236 = vadd.f32 %v234, %v235
        %v237 = vrot.slane %v236, 1
        %v238 = vadd.f32 %v236, %v237
        %s239 = vtos %v238
        %s240 = smul.f32 %s239, 0.0625
        %v241 = vstv %s240
        %vm242 = vcmask 0
        %243 = vst.msk [vmem:[%s195] sm:$0x1] %vm242, %v241
        %p244 = scmp.lt.s32.totalorder %s19, 1
        %s245 = scalar_select %p244, %s19, 1
        %s246 = scalar_lea.vmem %s2, %s245
        // Predicated region
        $region37: #{tpu_custom_call.1} parent=27 // pred_check
          %p247 = pneg %p89
        $region38: #{tpu_custom_call.1} parent=27 // pred_check_branch
          %249 = sbr.rel (%p247) target = $region40
        $region39: #{tpu_custom_call.1} parent=27 // pred_region
          _
        $region40: #{tpu_custom_call.1} parent=27 // pred_fallthru
          _
      $region28: #{tpu_custom_call.1} parent=5 // pred_fallthru
        _
      %p250 = scmp.le.s32.totalorder 2, %s14
      // Predicated region
      $region41: #{tpu_custom_call.1} parent=5 // pred_check
        %p251 = pneg %p250
      $region42: #{tpu_custom_call.1} parent=5 // pred_check_branch
        %253 = sbr.rel (%p251) target = $region44
      $region43: #{tpu_custom_call.1} parent=5 // pred_region
        %s254 = ssub.s32 %s14, 2
        // Predicated region
        $region45: #{tpu_custom_call.1} parent=43 // pred_check
          %p255 = pneg %p95
        $region46: #{tpu_custom_call.1} parent=43 // pred_check_branch
          %257 = sbr.rel (%p255) target = $region48
        $region47: #{tpu_custom_call.1} parent=43 // pred_region
          %p258 = scmp.lt.s32.totalorder %s20, 1
          %s259 = scalar_select %p258, %s20, 1
          %s260 = scalar_lea.vmem %s2, %s259
        $region48: #{tpu_custom_call.1} parent=43 // pred_fallthru
          _
      $region44: #{tpu_custom_call.1} parent=5 // pred_fallthru
        _
    $region6: #{tpu_custom_call.1} parent=1 // loop_footer
      %s18 = sadd.s32 1, %s14
    $region7: #{tpu_custom_call.1} parent=1 // loop_footer_branch
      %13 = sbr.rel target = $region3
    $region8: #{tpu_custom_call.1} parent=1 // loop_exit
      _
    %261 = vsyncpa [#allocation3], 1
    %s262 = scalar_lea.sflag [#allocation3], 1
    %263 = vsyncpa %s262, 1
    %264 = vsyncpa [#allocation5], 1
    %s265 = scalar_lea.sflag [#allocation5], 1
    %266 = vsyncpa %s265, 1

</llo_original>
